<compile_context>
chip_gen: v5e
topology: v5e:2x2
jax: 0.10.0
libtpu: 0.0.40
codegen_flags: <defaults>
</compile_context>

<pallas_src>
import functools

import jax
import jax.numpy as jnp
from jax import lax
from jax.experimental import pallas as pl
from jax.experimental.pallas import tpu as pltpu


def _round_up(x, m):
    return ((x + m - 1) // m) * m


def _ntxent_kernel(inv_t, n_valid, tr, tc, row_ref, colT_ref, denom_ref):
    """One (row_tile i, col_tile j) step of the exp-sum over the similarity row.

    row_ref:  (TR, C_pad)  normalized row features (resident across j)
    colT_ref: (C_pad, TC)  pre-transposed normalized column features (streamed)
    denom_ref:(TR, 1)      f32 output block, resident across j (accumulator)
    """
    i = pl.program_id(0)
    j = pl.program_id(1)

    @pl.when(j == 0)
    def _():
        denom_ref[...] = jnp.zeros_like(denom_ref)

    # (TR, TC) cosine-similarity tile on the MXU, f32 accumulation.
    sims = jnp.dot(row_ref[...], colT_ref[...],
                   preferred_element_type=jnp.float32)

    # logits - row_max == (sims - 1)/T for L2-normalized rows (diag is the max).
    # Any constant per-row shift cancels in pos - log(denom), so exactness of
    # the "max" does not matter.
    shifted = (sims - 1.0) * inv_t

    # Exclude the self-similarity diagonal (PyTorch neg_mask) and any padded
    # columns by zeroing their exp contribution — no cancellation, exact.
    row_ids = i * tr + lax.broadcasted_iota(jnp.int32, (tr, tc), 0)
    col_ids = j * tc + lax.broadcasted_iota(jnp.int32, (tr, tc), 1)
    keep = row_ids != col_ids
    if n_valid is not None:  # static: column padding present
        keep = jnp.logical_and(keep, col_ids < n_valid)

    denom_ref[...] += jnp.sum(jnp.where(keep, jnp.exp(shifted), 0.0),
                              axis=1, keepdims=True)


def nt_xent(feat1, feat2, temperature=0.07, base_temperature=0.07, *,
            row_tile=512, col_tile=1024, use_bf16_matmul=True):
    """SimCLR NT-Xent loss matching the PyTorch NT_Xent.forward (forward only)."""
    assert feat1.shape == feat2.shape and feat1.ndim == 2
    B, C = feat1.shape
    N = 2 * B
    inv_t = 1.0 / float(temperature)

    # ---- O(N*C) prep in plain XLA (hoisted out of the kernel) --------------
    features = jnp.concatenate([feat1, feat2], axis=0).astype(jnp.float32)
    norms = jnp.sqrt(jnp.sum(features * features, axis=1, keepdims=True))
    fn = features / jnp.maximum(norms, 1e-12)          # == F.normalize(dim=1)

    # Positive-pair logit (already shifted by the row max 1/T), f32-exact.
    partners = jnp.concatenate([fn[B:], fn[:B]], axis=0)
    pos_shifted = (jnp.sum(fn * partners, axis=1) - 1.0) * inv_t   # (N,)

    # Zero-pad the feature (lane / MXU-K) dim to a multiple of 128: norms and
    # dot products are unchanged.
    C_pad = _round_up(C, 128)
    if C_pad != C:
        fn = jnp.pad(fn, ((0, 0), (0, C_pad - C)))

    # Tile sizes + cdiv grid with padded rows/cols (never fall back to a full
    # (N,N) block).  TR multiple of 8 (sublane), TC multiple of 128 (lane).
    TR = min(_round_up(max(row_tile, 8), 8), _round_up(N, 8))
    TC = min(_round_up(max(col_tile, 128), 128), _round_up(N, 128))
    NR = _round_up(N, TR)
    NC = _round_up(N, TC)

    rows = fn if NR == N else jnp.pad(fn, ((0, NR - N), (0, 0)))
    # Pre-transposed (C_pad, NC) column operand: one O(N*C) XLA transpose
    # instead of a per-grid-step XLU transpose of the RHS.
    colsT = fn.T if NC == N else jnp.pad(fn.T, ((0, 0), (0, NC - N)))

    if use_bf16_matmul:
        # bf16 MXU operands + halved HBM streaming; f32 accumulation in-kernel.
        rows = rows.astype(jnp.bfloat16)
        colsT = colsT.astype(jnp.bfloat16)

    kernel = functools.partial(_ntxent_kernel, inv_t,
                               N if NC != N else None, TR, TC)

    denom = pl.pallas_call(
        kernel,
        out_shape=jax.ShapeDtypeStruct((NR, 1), jnp.float32),
        grid_spec=pltpu.PrefetchScalarGridSpec(
            num_scalar_prefetch=0,
            grid=(NR // TR, NC // TC),
            in_specs=[
                pl.BlockSpec((TR, C_pad), lambda i, j: (i, 0)),   # row tile
                pl.BlockSpec((C_pad, TC), lambda i, j: (0, j)),   # col tile (T)
            ],
            out_specs=pl.BlockSpec((TR, 1), lambda i, j: (i, 0)),  # accumulator
        ),
        compiler_params=pltpu.CompilerParams(
            # Row tiles independent -> split across v7x's two TensorCores;
            # column tiles accumulate into the resident output -> arbitrary.
            dimension_semantics=("parallel", "arbitrary"),
            # Above v5e/v6e's default scoped limit, below v7x's 64 MiB VMEM.
            vmem_limit_bytes=48 * 1024 * 1024,
        ),
    )(rows, colsT)

    # Tiny O(N) epilogue: drop padded rows, combine with the positive logit.
    log_prob = pos_shifted - jnp.log(denom[:N, 0])
    return -(temperature / base_temperature) * jnp.mean(log_prob)


def _nt_xent_ref(feat1, feat2, temperature=0.07, base_temperature=0.07):
    """Pure-JAX reference mirroring the PyTorch forward."""
    B = feat1.shape[0]
    f = jnp.concatenate([feat1, feat2], axis=0).astype(jnp.float32)
    f = f / jnp.maximum(jnp.linalg.norm(f, axis=1, keepdims=True), 1e-12)
    logits = (f @ f.T) / temperature
    logits = logits - jnp.max(logits, axis=1, keepdims=True)
    N = 2 * B
    eye = jnp.eye(N, dtype=bool)
    exp_logits = jnp.where(eye, 0.0, jnp.exp(logits))
    denom = exp_logits.sum(axis=1)
    pos = logits[jnp.arange(N), (jnp.arange(N) + B) % N]
    log_prob = pos - jnp.log(denom)
    return -(temperature / base_temperature) * jnp.mean(log_prob)


if __name__ == "__main__":
    key = jax.random.PRNGKey(0)
    k1, k2, k3, k4 = jax.random.split(key, 4)

    # 1) Small shape (B=4, C=32 -> N=8), single grid step, f32 MXU path,
    #    exercises padded-column masking (cols padded 8 -> 128).
    B, C = 4, 32
    feat1 = jax.random.normal(k1, (B, C), dtype=jnp.float32)
    feat2 = jax.random.normal(k2, (B, C), dtype=jnp.float32)
    loss = nt_xent(feat1, feat2, use_bf16_matmul=False)
    jax.block_until_ready(loss)
    ref = _nt_xent_ref(feat1, feat2)
    assert jnp.allclose(loss, ref, rtol=1e-4, atol=1e-4), (loss, ref)

    # 2) Multi-tile path: B=88, C=40 -> N=176; C padded to 128, rows padded to
    #    192 (TR=64 -> 3 row tiles), cols padded to 256 (TC=128 -> 2 col tiles).
    #    Exercises the j-axis accumulator, cross-tile diagonal masking, padded
    #    row/column handling.  f32 MXU path -> tight tolerance.
    B2, C2 = 88, 40
    g1 = jax.random.normal(k3, (B2, C2), dtype=jnp.float32)
    g2 = jax.random.normal(k4, (B2, C2), dtype=jnp.float32)
    loss2 = nt_xent(g1, g2, row_tile=64, col_tile=128, use_bf16_matmul=False)
    jax.block_until_ready(loss2)
    ref2 = _nt_xent_ref(g1, g2)
    assert jnp.allclose(loss2, ref2, rtol=1e-4, atol=1e-4), (loss2, ref2)

    # 3) Default (bf16 MXU operands, large tiles) path on the same data; looser
    #    tolerance consistent with bf16-rounded cosine similarities / T=0.07.
    loss3 = nt_xent(g1, g2)
    jax.block_until_ready(loss3)
    assert jnp.allclose(loss3, ref2, rtol=5e-2, atol=5e-2), (loss3, ref2)

    print("KERNEL_OK")
</pallas_src>

<mosaic_0001>
module attributes {stable_mosaic.version = 11 : i64} {
  func.func @_ntxent_kernel(%arg0: i32, %arg1: i32, %arg2: memref<8x128xf32, #tpu.memory_space<vmem>>, %arg3: memref<128x128xf32, #tpu.memory_space<vmem>>, %arg4: memref<8x1xf32, #tpu.memory_space<vmem>>) attributes {dimension_semantics = [#tpu.dimension_semantics<parallel>, #tpu.dimension_semantics<arbitrary>], iteration_bounds = array<i64: 1, 1>, scalar_prefetch = 0 : i64, scratch_operands = 0 : i64, tpu.core_type = #tpu.core_type<tc>, window_params = [{transform_indices = @transform_0, window_bounds = array<i64: 8, 128>}, {transform_indices = @transform_1, window_bounds = array<i64: 128, 128>}, {transform_indices = @transform_2, window_bounds = array<i64: 8, 1>}]} {
    %c0_i32 = arith.constant 0 : i32
    %0 = arith.cmpi eq, %arg1, %c0_i32 : i32
    %1 = arith.extui %0 : i1 to i32
    %c0_i32_0 = arith.constant 0 : i32
    %2 = arith.cmpi ne, %1, %c0_i32_0 : i32
    scf.if %2 {
      %cst_13 = arith.constant 0.000000e+00 : f32
      %30 = vector.broadcast %cst_13 : f32 to vector<8x1xf32>
      %c0_14 = arith.constant 0 : index
      %c0_15 = arith.constant 0 : index
      %31 = vector.load %arg4[%c0_14, %c0_15] : memref<8x1xf32, #tpu.memory_space<vmem>>, vector<8x1xf32>
      tpu.vector_store %arg4[%c0_14, %c0_15], %30 {strides = array<i32>} : memref<8x1xf32, #tpu.memory_space<vmem>>, vector<8x1xf32>,
    } else {
    }
    %c0 = arith.constant 0 : index
    %c0_1 = arith.constant 0 : index
    %3 = vector.load %arg2[%c0, %c0_1] : memref<8x128xf32, #tpu.memory_space<vmem>>, vector<8x128xf32>
    %c0_2 = arith.constant 0 : index
    %c0_3 = arith.constant 0 : index
    %4 = vector.load %arg3[%c0_2, %c0_3] : memref<128x128xf32, #tpu.memory_space<vmem>>, vector<128x128xf32>
    %cst = arith.constant dense<0.000000e+00> : vector<8x128xf32>
    %5 = tpu.matmul %3, %4, %cst {dimension_numbers = #tpu.dot_dimension_numbers<[1], [0], [0], [1], [0, 0, 1, 1], [], []>} : vector<8x128xf32>, vector<128x128xf32>, vector<8x128xf32> -> vector<8x128xf32>
    %cst_4 = arith.constant 1.000000e+00 : f32
    %6 = vector.broadcast %cst_4 : f32 to vector<8x128xf32>
    %7 = arith.subf %5, %6 : vector<8x128xf32>
    %cst_5 = arith.constant 14.2857141 : f32
    %8 = vector.broadcast %cst_5 : f32 to vector<8x128xf32>
    %9 = arith.mulf %7, %8 : vector<8x128xf32>
    %c8_i32 = arith.constant 8 : i32
    %10 = arith.muli %arg0, %c8_i32 : i32
    %11 = tpu.iota {dimensions = array<i32: 0>} : vector<8x128xi32>
    %12 = vector.broadcast %10 : i32 to vector<8x128xi32>
    %13 = arith.addi %12, %11 : vector<8x128xi32>
    %c128_i32 = arith.constant 128 : i32
    %14 = arith.muli %arg1, %c128_i32 : i32
    %15 = tpu.iota {dimensions = array<i32: 1>} : vector<8x128xi32>
    %16 = vector.broadcast %14 : i32 to vector<8x128xi32>
    %17 = arith.addi %16, %15 : vector<8x128xi32>
    %18 = arith.cmpi ne, %13, %17 : vector<8x128xi32>
    %c8_i32_6 = arith.constant 8 : i32
    %19 = vector.broadcast %c8_i32_6 : i32 to vector<8x128xi32>
    %20 = arith.cmpi slt, %17, %19 : vector<8x128xi32>
    %21 = arith.andi %18, %20 : vector<8x128xi1>
    %c0_7 = arith.constant 0 : index
    %c0_8 = arith.constant 0 : index
    %22 = vector.load %arg4[%c0_7, %c0_8] : memref<8x1xf32, #tpu.memory_space<vmem>>, vector<8x1xf32>
    %23 = math.exp %9 : vector<8x128xf32>
    %cst_9 = arith.constant 0.000000e+00 : f32
    %24 = vector.broadcast %cst_9 : f32 to vector<8x128xf32>
    %25 = arith.select %21, %23, %24 : vector<8x128xi1>, vector<8x128xf32>
    %cst_10 = arith.constant dense<0.000000e+00> : vector<8xf32>
    %26 = vector.multi_reduction <add>, %25, %cst_10 [1] : vector<8x128xf32> to vector<8xf32>
    %27 = vector.shape_cast %26 : vector<8xf32> to vector<8x1xf32>
    %28 = arith.addf %22, %27 : vector<8x1xf32>
    %c0_11 = arith.constant 0 : index
    %c0_12 = arith.constant 0 : index
    %29 = vector.load %arg4[%c0_11, %c0_12] : memref<8x1xf32, #tpu.memory_space<vmem>>, vector<8x1xf32>
    tpu.vector_store %arg4[%c0_11, %c0_12], %28 {strides = array<i32>} : memref<8x1xf32, #tpu.memory_space<vmem>>, vector<8x1xf32>,
    return
  }
  func.func @transform_0(%arg0: i32, %arg1: i32) -> (i32, i32) {
    %c0_i32 = arith.constant 0 : i32
    %c0_i32_0 = arith.constant 0 : i32
    return %arg0, %c0_i32 : i32, i32
  }
  func.func @transform_1(%arg0: i32, %arg1: i32) -> (i32, i32) {
    %c0_i32 = arith.constant 0 : i32
    %c0_i32_0 = arith.constant 0 : i32
    return %c0_i32, %arg1 : i32, i32
  }
  func.func @transform_2(%arg0: i32, %arg1: i32) -> (i32, i32) {
    %c0_i32 = arith.constant 0 : i32
    %c0_i32_0 = arith.constant 0 : i32
    return %arg0, %c0_i32 : i32, i32
  }
}

</mosaic_0001>

<llo_original>
// kernel: tpu_custom_call.1
$region0: #{tpu_custom_call.1}
  #allocation0 [shape = 'u32[]', space=smem, size = 0x4, offset = 0x4, fixed_abs, tag = 'smem constant byte address 0x4 - core index']
  #allocation1 [shape = 'u32[72,128]{1,0:T(1,128)}', space=vmem, size = 0x9000, scoped, tag = 'internal scratch']
  %s0 = inlined_call_operand.hbm [shape: f32[8,128], index: 0, kind: input, shape index: {}]
  %s1 = inlined_call_operand.hbm [shape: f32[128,128], index: 1, kind: input, shape index: {}]
  %s2 = inlined_call_operand.vmem [shape: f32[8,1], index: 2, kind: output, shape index: {}]
  %s3 = sld [smem:[#allocation0]]
  $region30: #{tpu_custom_call.1} parent=0
    _
  %s5 = ssub.s32 1, %s3
  %s6 = scalar_select 0, %s5, %s3
  $region1: #{tpu_custom_call.1} parent=0
    #allocation2 [shape = 'u8[4096]{0}', space=vmem, size = 0x1000, scoped, tag = 'input window, operand 0, single buffered']
    #allocation3 [shape = 's32[1]{0}', space=sflag, size = 0x4, scoped, tag = 'scoped memory for tpu_custom_call.1']
    #allocation4 [shape = 'u8[65536]{0}', space=vmem, size = 0x10000, scoped, tag = 'input window, operand 1, single buffered']
    #allocation5 [shape = 's32[1]{0}', space=sflag, size = 0x4, scoped, tag = 'scoped memory for tpu_custom_call.1']
    %7 = vsyncpa [#allocation3], 0
    %8 = vsyncpa [#allocation5], 0
    // Predicated region
    $region2: #{tpu_custom_call.1} parent=1 // pred_check
      _
    $region3: #{tpu_custom_call.1} parent=1 // pred_check_branch
      %10 = sbr.rel (0) target = $region5
    $region4: #{tpu_custom_call.1} parent=1 // pred_region
      %12 = vsyncadd [#allocation3], 0
      %s14 = sshll.u32 %s0, 4
      %s15 = int_to_ptr.hbm [resolvable:$true] %s14
      %s16 = sshll.u32 [#allocation2], 4
      %s17 = int_to_ptr.vmem [resolvable:$true] %s16
      %19 = dma.hbm_to_vmem [thread:$0]  %s15, 128, %s17, [#allocation3]
    $region5: #{tpu_custom_call.1} parent=1 // pred_fallthru
      _
    // Predicated region
    $region6: #{tpu_custom_call.1} parent=1 // pred_check
      _
    $region7: #{tpu_custom_call.1} parent=1 // pred_check_branch
      %21 = sbr.rel (0) target = $region9
    $region8: #{tpu_custom_call.1} parent=1 // pred_region
      %23 = vsyncadd [#allocation5], 0
      %s24 = sshll.u32 %s1, 4
      %s25 = int_to_ptr.hbm [resolvable:$true] %s24
      %s26 = sshll.u32 [#allocation4], 4
      %s27 = int_to_ptr.vmem [resolvable:$true] %s26
      %32 = dma.hbm_to_vmem [thread:$0]  %s25, 2048, %s27, [#allocation5], 128, 128, 8
    $region9: #{tpu_custom_call.1} parent=1 // pred_fallthru
      _
    // Predicated region
    $region10: #{tpu_custom_call.1} parent=1 // pred_check
      _
    $region11: #{tpu_custom_call.1} parent=1 // pred_check_branch
      %34 = sbr.rel (0) target = $region13
    $region12: #{tpu_custom_call.1} parent=1 // pred_region
      %36 = dma.done [#allocation3], 128
    $region13: #{tpu_custom_call.1} parent=1 // pred_fallthru
      _
    // Predicated region
    $region14: #{tpu_custom_call.1} parent=1 // pred_check
      _
    $region15: #{tpu_custom_call.1} parent=1 // pred_check_branch
      %38 = sbr.rel (0) target = $region17
    $region16: #{tpu_custom_call.1} parent=1 // pred_region
      %40 = dma.done [#allocation5], 2048
    $region17: #{tpu_custom_call.1} parent=1 // pred_fallthru
      _
    %p41 = scmp.eq.s32.totalorder 0, 0
    // Predicated region
    $region18: #{tpu_custom_call.1} parent=1 // pred_check
      %p42 = pneg %p41
    $region19: #{tpu_custom_call.1} parent=1 // pred_check_branch
      %44 = sbr.rel (%p42) target = $region21
    $region20: #{tpu_custom_call.1} parent=1 // pred_region
      %vm45 = vcmask 7168
      %46 = vst.msk [vmem:[%s2] sm:$0xff] %vm45, 0.0
    $region21: #{tpu_custom_call.1} parent=1 // pred_fallthru
      _
    %v47 = vld [vmem:[#allocation2] sm:$0xff]
    %v48 = vld [vmem:[#allocation4] sm:$0xff]
    %v49 = vld [vmem:[#allocation4 + $0x8] sm:$0xff]
    %v50 = vld [vmem:[#allocation4 + $0x10] sm:$0xff]
    %v51 = vld [vmem:[#allocation4 + $0x18] sm:$0xff]
    %v52 = vld [vmem:[#allocation4 + $0x20] sm:$0xff]
    %v53 = vld [vmem:[#allocation4 + $0x28] sm:$0xff]
    %v54 = vld [vmem:[#allocation4 + $0x30] sm:$0xff]
    %v55 = vld [vmem:[#allocation4 + $0x38] sm:$0xff]
    %v56 = vld [vmem:[#allocation4 + $0x40] sm:$0xff]
    %v57 = vld [vmem:[#allocation4 + $0x48] sm:$0xff]
    %v58 = vld [vmem:[#allocation4 + $0x50] sm:$0xff]
    %v59 = vld [vmem:[#allocation4 + $0x58] sm:$0xff]
    %v60 = vld [vmem:[#allocation4 + $0x60] sm:$0xff]
    %v61 = vld [vmem:[#allocation4 + $0x68] sm:$0xff]
    %v62 = vld [vmem:[#allocation4 + $0x70] sm:$0xff]
    %v63 = vld [vmem:[#allocation4 + $0x78] sm:$0xff]
    %64 = vmatpush.msra.mxu0 %v63
    %65 = vmatpush.msra.mxu0 %v62
    %66 = vmatpush.msra.mxu0 %v61
    %67 = vmatpush.msra.mxu0 %v60
    %68 = vmatpush.msra.mxu0 %v59
    %69 = vmatpush.msra.mxu0 %v58
    %70 = vmatpush.msra.mxu0 %v57
    %71 = vmatpush.msra.mxu0 %v56
    %72 = vmatpush.msra.mxu0 %v55
    %73 = vmatpush.msra.mxu0 %v54
    %74 = vmatpush.msra.mxu0 %v53
    %75 = vmatpush.msra.mxu0 %v52
    %76 = vmatpush.msra.mxu0 %v51
    %77 = vmatpush.msra.mxu0 %v50
    %78 = vmatpush.msra.mxu0 %v49
    %79 = vmatpush.msra.mxu0 %v48
    %80 = vmatmul.f32.gmra.mxu0 %v47
    %v81 = vpop.f32.mrf.mxu0
    %v82 = vadd.f32 0.0, %v81
    %83 = vdwg.mxu0
    %v84 = vsub.f32 %v82, 1.0
    %v85 = vmul.f32 %v84, 14.285714
    %s86 = smul.u32 0, 8
    %v87 = vlaneseq
    %v88 = vshrl.u32 %v87, 7
    %v89 = vstv %s86
    %v90 = vadd.s32 %v89, %v88
    %s91 = smul.u32 0, 128
    %v92 = vlaneseq
    %v93 = vand.u32 %v92, 127
    %v94 = vstv %s91
    %v95 = vadd.s32 %v94, %v93
    %vm96 = vcmp.ne.s32.totalorder %v90, %v95
    %vm97 = vcmp.lt.s32.totalorder %v95, 8
    %vm98 = vmand %vm96, %vm97
    %v99 = vld [vmem:[%s2] sm:$0xff]
    %v100 = vmul.f32 %v85, 1.442695
    %v101 = vpow.pop %v100
    %v102 = vsel %vm98, %v101, 0.0
    %103 = vadd.xlane.f32.xlu0 %v102
    %v104 = vpop.xlane.xlu0 %103
    %v105 = vadd.f32 %v99, %v104
    %vm106 = vcmask 7168
    %107 = vst.msk [vmem:[%s2] sm:$0xff] %vm106, %v105
    // Predicated region
    $region22: #{tpu_custom_call.1} parent=1 // pred_check
      _
    $region23: #{tpu_custom_call.1} parent=1 // pred_check_branch
      %109 = sbr.rel (0) target = $region25
    $region24: #{tpu_custom_call.1} parent=1 // pred_region
      _
    $region25: #{tpu_custom_call.1} parent=1 // pred_fallthru
      _
    // Predicated region
    $region26: #{tpu_custom_call.1} parent=1 // pred_check
      _
    $region27: #{tpu_custom_call.1} parent=1 // pred_check_branch
      %111 = sbr.rel (0) target = $region29
    $region28: #{tpu_custom_call.1} parent=1 // pred_region
      _
    $region29: #{tpu_custom_call.1} parent=1 // pred_fallthru
      _
    %112 = vsyncpa [#allocation3], 1
    %113 = vsyncpa [#allocation5], 1

</llo_original>
